<compile_context>
chip_gen: v7x
topology: tpu7x:2x2x1
jax: 0.10.0
libtpu: 0.0.40
codegen_flags: <defaults>
</compile_context>

<pallas_src>
import functools

import jax
import jax.numpy as jnp
from jax.experimental import pallas as pl
from jax.experimental.pallas import tpu as pltpu


# ----------------------------------------------------------------------------
# Pallas kernel: whole critic-MLP forward for one batch tile.
#   x_ref  : (batch_tile, d_in)   input dtype (cast to matmul dtype in-kernel)
#   w1_ref : (d_in, h1)           compute_dtype      b1_ref : (1, h1)  f32
#   w2_ref : (h1, h2)             compute_dtype      b2_ref : (1, h2)  f32
#   w3_ref : (1, h2)              compute_dtype      b3_ref : (1, 1)   f32
#   o_ref  : (1, batch_tile)      f32  (lane-dense: batch on the lane axis)
# ----------------------------------------------------------------------------
def critic_kernel(x_ref, w1_ref, b1_ref, w2_ref, b2_ref, w3_ref, b3_ref, o_ref):
    # Cast the activation tile here (cheap VPU op) instead of a separate un-fused
    # whole-array XLA cast pass in the wrapper.
    x = x_ref[...].astype(w1_ref.dtype)

    # fc0 + ReLU : MXU matmul with f32 accumulation; bias/ReLU on the VPU in f32.
    # (Folding b1 into the K=32 contraction was considered; kept as a VPU add for
    #  simplicity — the extra in-kernel concat would cost a per-step VMEM copy.)
    h1 = jnp.dot(x, w1_ref[...], preferred_element_type=jnp.float32)
    h1 = jnp.maximum(h1 + b1_ref[...], 0.0)

    # fc1 + ReLU
    h2 = jnp.dot(h1.astype(w2_ref.dtype), w2_ref[...],
                 preferred_element_type=jnp.float32)
    h2 = jnp.maximum(h2 + b2_ref[...], 0.0)

    # Critic head (single output column): VPU multiply + XLU lane reduction, then
    # a lane-dense (1, batch_tile) row so the store is an unmasked vst.
    w3_row = w3_ref[...].astype(jnp.float32)          # (1, h2)
    v = jnp.sum(h2 * w3_row, axis=-1)                 # (batch_tile,)
    out_row = v[None, :] + b3_ref[...]                # (1, batch_tile)
    o_ref[...] = out_row.astype(o_ref.dtype)


# ----------------------------------------------------------------------------
# Wrapper: tiles the batch axis (no padding — Pallas handles the ragged tail),
# presents a lane-dense output slab and returns the PyTorch-shaped (B, 1) result.
# ----------------------------------------------------------------------------
def critic_forward(state, params, *, batch_tile=None, max_batch_tile=4096,
                   compute_dtype=jnp.float32, use_pallas=None):
    w1, b1, w2, b2, w3, b3 = params
    B, d_in = state.shape
    h1d = w1.shape[1]
    h2d = w2.shape[1]
    assert w3.shape == (1, h2d), "w3 must be the (1, hidden) PyTorch row vector"

    # Tiny batches: one padded 128-row tile is nearly pure launch/pipeline
    # overhead — plain XLA wins. Callers can force the Pallas path for testing.
    if use_pallas is None:
        use_pallas = B >= 128
    if not use_pallas:
        return critic_reference(state, params)

    assert max_batch_tile % 128 == 0
    if batch_tile is None:
        # Rows a multiple of 128; aim for >=2 grid steps (v7x has 2 TensorCores)
        # on moderate batches; cap at max_batch_tile for huge batches so each step
        # amortises the ~0.35 us fixed per-step overhead.
        batch_tile = min(max_batch_tile, 128 * pl.cdiv(B, 256))
        batch_tile = max(128, batch_tile)
    assert batch_tile % 128 == 0, "batch_tile must be a multiple of 128"

    grid = (pl.cdiv(B, batch_tile),)

    # Weights in the matmul compute dtype (bf16 = v6e/v7x MXU fast path); they are
    # tiny, so the wrapper-side cast is negligible. Biases stay f32 so bias-add /
    # ReLU run in f32 on every generation. Activations are NOT cast here.
    w1c = w1.astype(compute_dtype)
    w2c = w2.astype(compute_dtype)
    w3c = w3.astype(compute_dtype)

    # Weights/biases are fully VMEM-resident; constant index maps mean their
    # blocks are never re-fetched across grid steps.
    rep = lambda shape: pl.BlockSpec(shape, lambda i: (0, 0))

    x_isz = jnp.dtype(state.dtype).itemsize
    w_isz = jnp.dtype(compute_dtype).itemsize
    n_w = d_in * h1d + h1d * h2d + h2d
    n_b = h1d + h2d + 1

    # Explicit scoped-VMEM limit: >=32 MiB so large tiles also land on v5e
    # (16 MiB default), capped well under v7x's 64 MiB physical VMEM.
    vmem_need = (
        2 * batch_tile * d_in * x_isz          # double-buffered activation tiles
        + 2 * batch_tile * 4                   # double-buffered (1, tile) f32 out
        + 2 * n_w * w_isz + 2 * n_b * 4        # weights + biases
        + batch_tile * (h1d + h2d) * 4         # f32 intermediates (h1, h2)
    )
    vmem_limit = int(min(48 * 2**20, max(32 * 2**20, int(vmem_need * 1.5))))

    flops = 2 * B * (d_in * h1d + h1d * h2d + h2d)
    bytes_accessed = B * d_in * x_isz + n_w * w_isz + n_b * 4 + B * 4

    out_row = pl.pallas_call(
        critic_kernel,
        out_shape=jax.ShapeDtypeStruct((1, B), jnp.float32),
        grid_spec=pltpu.PrefetchScalarGridSpec(
            num_scalar_prefetch=0,
            grid=grid,
            in_specs=[
                pl.BlockSpec((batch_tile, d_in), lambda i: (i, 0)),  # state tile
                rep((d_in, h1d)),                                    # W1
                rep((1, h1d)),                                       # b1
                rep((h1d, h2d)),                                     # W2
                rep((1, h2d)),                                       # b2
                rep((1, h2d)),                                       # W3 row
                rep((1, 1)),                                         # b3
            ],
            # Lane-dense output: batch on the lane axis -> unmasked stores.
            out_specs=pl.BlockSpec((1, batch_tile), lambda i: (0, i)),
        ),
        compiler_params=pltpu.CompilerParams(
            dimension_semantics=("parallel",),   # batch tiles shard across TCs (v7x)
            vmem_limit_bytes=vmem_limit,
        ),
        cost_estimate=pl.CostEstimate(
            flops=flops, transcendentals=0, bytes_accessed=bytes_accessed),
    )(state, w1c, b1, w2c, b2, w3c, b3)

    # (1, B) lane-dense slab -> (B, 1) PyTorch-style output.
    return out_row[0][:, None]


# ----------------------------------------------------------------------------
# Deterministic parameter init (matches CriticNetwork.__init__):
# Xavier-uniform weights, zero biases.
# ----------------------------------------------------------------------------
def xavier_uniform(key, fan_in, fan_out, shape):
    bound = jnp.sqrt(6.0 / (fan_in + fan_out))
    return jax.random.uniform(key, shape, dtype=jnp.float32,
                              minval=-bound, maxval=bound)


def init_critic_params(key, input_dim, mlp_list=(256, 128)):
    k1, k2, k3 = jax.random.split(key, 3)
    # W1, W2 stored as (in, out) == PyTorch weight.T; W3 as the native (1, hidden).
    w1 = xavier_uniform(k1, input_dim, mlp_list[0], (input_dim, mlp_list[0]))
    b1 = jnp.zeros((1, mlp_list[0]), jnp.float32)
    w2 = xavier_uniform(k2, mlp_list[0], mlp_list[1], (mlp_list[0], mlp_list[1]))
    b2 = jnp.zeros((1, mlp_list[1]), jnp.float32)
    w3 = xavier_uniform(k3, mlp_list[1], 1, (1, mlp_list[1]))
    b3 = jnp.zeros((1, 1), jnp.float32)
    return (w1, b1, w2, b2, w3, b3)


def critic_reference(state, params):
    """Pure-JAX reference (also the tiny-batch fallback path)."""
    w1, b1, w2, b2, w3, b3 = params
    h = jnp.maximum(state @ w1 + b1, 0.0)
    h = jnp.maximum(h @ w2 + b2, 0.0)
    return h @ w3.T + b3


if __name__ == "__main__":
    key = jax.random.PRNGKey(0)
    k_param, k_state = jax.random.split(key)

    batch = 8
    input_dim = 32
    mlp_list = (256, 128)

    params = init_critic_params(k_param, input_dim, mlp_list)
    state = jax.random.normal(k_state, (batch, input_dim), dtype=jnp.float32)
    ref = critic_reference(state, params)

    # Small batch, forced through the Pallas path (default would use the XLA
    # fallback for B < 128). f32 matmul operands: exact-ish vs reference.
    out = jax.block_until_ready(critic_forward(state, params, use_pallas=True))
    assert out.shape == (batch, 1), out.shape
    assert jnp.allclose(out, ref, atol=1e-4, rtol=1e-4), "f32 mismatch vs reference"

    # bf16 matmul operands (v6e/v7x MXU fast path); activations cast in-kernel,
    # f32 accumulation + f32 bias/ReLU.
    out_bf16 = jax.block_until_ready(
        critic_forward(state, params, use_pallas=True, compute_dtype=jnp.bfloat16))
    assert out_bf16.shape == (batch, 1), out_bf16.shape
    assert jnp.allclose(out_bf16, ref, atol=5e-2, rtol=5e-2), "bf16 mismatch vs reference"

    # Ragged multi-tile batch (389 rows -> tile 256, grid of 2 steps, ragged edge
    # block handled by Pallas boundary masking — no jnp.pad pass).
    state_r = jax.random.normal(jax.random.PRNGKey(1), (389, input_dim),
                                dtype=jnp.float32)
    out_r = jax.block_until_ready(critic_forward(state_r, params))
    ref_r = critic_reference(state_r, params)
    assert out_r.shape == (389, 1), out_r.shape
    assert jnp.allclose(out_r, ref_r, atol=1e-4, rtol=1e-4), "ragged mismatch vs reference"

    # Default tiny-batch path (plain-XLA fallback) for completeness.
    out_small = jax.block_until_ready(critic_forward(state, params))
    assert out_small.shape == (batch, 1)
    assert jnp.allclose(out_small, ref, atol=1e-5, rtol=1e-5), "fallback mismatch"

    print("KERNEL_OK")
</pallas_src>

<mosaic_0001>
module attributes {stable_mosaic.version = 11 : i64} {
  func.func @critic_kernel(%arg0: i32, %arg1: memref<128x32xf32, #tpu.memory_space<vmem>>, %arg2: memref<32x256xf32, #tpu.memory_space<vmem>>, %arg3: memref<1x256xf32, #tpu.memory_space<vmem>>, %arg4: memref<256x128xf32, #tpu.memory_space<vmem>>, %arg5: memref<1x128xf32, #tpu.memory_space<vmem>>, %arg6: memref<1x128xf32, #tpu.memory_space<vmem>>, %arg7: memref<1x1xf32, #tpu.memory_space<vmem>>, %arg8: memref<1x128xf32, #tpu.memory_space<vmem>>) attributes {dimension_semantics = [#tpu.dimension_semantics<parallel>], iteration_bounds = array<i64: 1>, scalar_prefetch = 0 : i64, scratch_operands = 0 : i64, tpu.core_type = #tpu.core_type<tc>, window_params = [{transform_indices = @transform_0, window_bounds = array<i64: 128, 32>}, {pipeline_mode = #tpu.pipeline_mode<synchronous>, transform_indices = @transform_1, window_bounds = array<i64: 32, 256>}, {pipeline_mode = #tpu.pipeline_mode<synchronous>, transform_indices = @transform_2, window_bounds = array<i64: 1, 256>}, {pipeline_mode = #tpu.pipeline_mode<synchronous>, transform_indices = @transform_3, window_bounds = array<i64: 256, 128>}, {pipeline_mode = #tpu.pipeline_mode<synchronous>, transform_indices = @transform_4, window_bounds = array<i64: 1, 128>}, {pipeline_mode = #tpu.pipeline_mode<synchronous>, transform_indices = @transform_5, window_bounds = array<i64: 1, 128>}, {pipeline_mode = #tpu.pipeline_mode<synchronous>, transform_indices = @transform_6, window_bounds = array<i64: 1, 1>}, {transform_indices = @transform_7, window_bounds = array<i64: 1, 128>}]} {
    %c0 = arith.constant 0 : index
    %c0_0 = arith.constant 0 : index
    %0 = vector.load %arg1[%c0, %c0_0] : memref<128x32xf32, #tpu.memory_space<vmem>>, vector<128x32xf32>
    %c0_1 = arith.constant 0 : index
    %c0_2 = arith.constant 0 : index
    %1 = vector.load %arg2[%c0_1, %c0_2] : memref<32x256xf32, #tpu.memory_space<vmem>>, vector<32x256xf32>
    %cst = arith.constant dense<0.000000e+00> : vector<128x256xf32>
    %2 = tpu.matmul %0, %1, %cst {dimension_numbers = #tpu.dot_dimension_numbers<[1], [0], [0], [1], [0, 0, 1, 1], [], []>} : vector<128x32xf32>, vector<32x256xf32>, vector<128x256xf32> -> vector<128x256xf32>
    %c0_3 = arith.constant 0 : index
    %c0_4 = arith.constant 0 : index
    %3 = vector.load %arg3[%c0_3, %c0_4] : memref<1x256xf32, #tpu.memory_space<vmem>>, vector<1x256xf32>
    %4 = vector.broadcast %3 : vector<1x256xf32> to vector<128x256xf32>
    %5 = arith.addf %2, %4 : vector<128x256xf32>
    %cst_5 = arith.constant 0.000000e+00 : f32
    %6 = vector.broadcast %cst_5 : f32 to vector<128x256xf32>
    %7 = arith.maximumf %5, %6 : vector<128x256xf32>
    %c0_6 = arith.constant 0 : index
    %c0_7 = arith.constant 0 : index
    %8 = vector.load %arg4[%c0_6, %c0_7] : memref<256x128xf32, #tpu.memory_space<vmem>>, vector<256x128xf32>
    %cst_8 = arith.constant dense<0.000000e+00> : vector<128x128xf32>
    %9 = tpu.matmul %7, %8, %cst_8 {dimension_numbers = #tpu.dot_dimension_numbers<[1], [0], [0], [1], [0, 0, 1, 1], [], []>} : vector<128x256xf32>, vector<256x128xf32>, vector<128x128xf32> -> vector<128x128xf32>
    %c0_9 = arith.constant 0 : index
    %c0_10 = arith.constant 0 : index
    %10 = vector.load %arg5[%c0_9, %c0_10] : memref<1x128xf32, #tpu.memory_space<vmem>>, vector<1x128xf32>
    %11 = vector.broadcast %10 : vector<1x128xf32> to vector<128x128xf32>
    %12 = arith.addf %9, %11 : vector<128x128xf32>
    %cst_11 = arith.constant 0.000000e+00 : f32
    %13 = vector.broadcast %cst_11 : f32 to vector<128x128xf32>
    %14 = arith.maximumf %12, %13 : vector<128x128xf32>
    %c0_12 = arith.constant 0 : index
    %c0_13 = arith.constant 0 : index
    %15 = vector.load %arg6[%c0_12, %c0_13] : memref<1x128xf32, #tpu.memory_space<vmem>>, vector<1x128xf32>
    %16 = vector.broadcast %15 : vector<1x128xf32> to vector<128x128xf32>
    %17 = arith.mulf %14, %16 : vector<128x128xf32>
    %cst_14 = arith.constant dense<0.000000e+00> : vector<128xf32>
    %18 = vector.multi_reduction <add>, %17, %cst_14 [1] : vector<128x128xf32> to vector<128xf32>
    %19 = vector.shape_cast %18 : vector<128xf32> to vector<1x128xf32>
    %c0_15 = arith.constant 0 : index
    %c0_16 = arith.constant 0 : index
    %20 = vector.load %arg7[%c0_15, %c0_16] : memref<1x1xf32, #tpu.memory_space<vmem>>, vector<1x1xf32>
    %21 = vector.broadcast %20 : vector<1x1xf32> to vector<1x128xf32>
    %22 = arith.addf %19, %21 : vector<1x128xf32>
    %c0_17 = arith.constant 0 : index
    %c0_18 = arith.constant 0 : index
    %23 = vector.load %arg8[%c0_17, %c0_18] : memref<1x128xf32, #tpu.memory_space<vmem>>, vector<1x128xf32>
    tpu.vector_store %arg8[%c0_17, %c0_18], %22 {strides = array<i32>} : memref<1x128xf32, #tpu.memory_space<vmem>>, vector<1x128xf32>,
    return
  }
  func.func @transform_0(%arg0: i32) -> (i32, i32) {
    %c0_i32 = arith.constant 0 : i32
    %c0_i32_0 = arith.constant 0 : i32
    return %arg0, %c0_i32 : i32, i32
  }
  func.func @transform_1(%arg0: i32) -> (i32, i32) {
    %c0_i32 = arith.constant 0 : i32
    %c0_i32_0 = arith.constant 0 : i32
    %c0_i32_1 = arith.constant 0 : i32
    return %c0_i32, %c0_i32_0 : i32, i32
  }
  func.func @transform_2(%arg0: i32) -> (i32, i32) {
    %c0_i32 = arith.constant 0 : i32
    %c0_i32_0 = arith.constant 0 : i32
    %c0_i32_1 = arith.constant 0 : i32
    return %c0_i32, %c0_i32_0 : i32, i32
  }
  func.func @transform_3(%arg0: i32) -> (i32, i32) {
    %c0_i32 = arith.constant 0 : i32
    %c0_i32_0 = arith.constant 0 : i32
    %c0_i32_1 = arith.constant 0 : i32
    return %c0_i32, %c0_i32_0 : i32, i32
  }
  func.func @transform_4(%arg0: i32) -> (i32, i32) {
    %c0_i32 = arith.constant 0 : i32
    %c0_i32_0 = arith.constant 0 : i32
    %c0_i32_1 = arith.constant 0 : i32
    return %c0_i32, %c0_i32_0 : i32, i32
  }
  func.func @transform_5(%arg0: i32) -> (i32, i32) {
    %c0_i32 = arith.constant 0 : i32
    %c0_i32_0 = arith.constant 0 : i32
    %c0_i32_1 = arith.constant 0 : i32
    return %c0_i32, %c0_i32_0 : i32, i32
  }
  func.func @transform_6(%arg0: i32) -> (i32, i32) {
    %c0_i32 = arith.constant 0 : i32
    %c0_i32_0 = arith.constant 0 : i32
    %c0_i32_1 = arith.constant 0 : i32
    return %c0_i32, %c0_i32_0 : i32, i32
  }
  func.func @transform_7(%arg0: i32) -> (i32, i32) {
    %c0_i32 = arith.constant 0 : i32
    %c0_i32_0 = arith.constant 0 : i32
    return %c0_i32, %arg0 : i32, i32
  }
}

</mosaic_0001>

<llo_original>
// kernel: tpu_custom_call.1
$region0: #{tpu_custom_call.1}
  #allocation0 [shape = 'u32[]', space=smem, size = 0x4, offset = 0x4, fixed_abs, tag = 'smem constant byte address 0x4 - core index']
  #allocation1 [shape = 'u32[144,128]{1,0:T(1,128)}', space=vmem, size = 0x12000, scoped, tag = 'internal scratch']
  #allocation2 [shape = 'f32[1,1]{1,0:T(1,128)S(1)}', space=vmem, size = 0x200, scoped, tag = 'scoped memory for tpu_custom_call.1']
  %s0 = inlined_call_operand.hbm [shape: f32[8,32], index: 0, kind: input, shape index: {}]
  %s1 = inlined_call_operand.hbm [shape: f32[32,256], index: 1, kind: input, shape index: {}]
  %s2 = inlined_call_operand.vmem [shape: f32[1,256], index: 2, kind: input, shape index: {}]
  %s3 = inlined_call_operand.hbm [shape: f32[256,128], index: 3, kind: input, shape index: {}]
  %s4 = inlined_call_operand.vmem [shape: f32[1,128], index: 4, kind: input, shape index: {}]
  %s5 = inlined_call_operand.vmem [shape: f32[1,128], index: 5, kind: input, shape index: {}]
  %s6 = inlined_call_operand.<no memory space> [shape: f32[1,1], index: 6, kind: input, shape index: {}]
  %s7 = inlined_call_operand.hbm [shape: f32[1,8], index: 7, kind: output, shape index: {}]
  %s8 = sld [smem:[#allocation0]]
  $region50: #{tpu_custom_call.1} parent=0
    _
  %s10 = ssub.s32 1, %s8
  %s11 = scalar_select 0, %s10, %s8
  %v12 = vstv %s6
  %13 = vst [vmem:[#allocation2] sm:$0x1] %v12
  $region1: #{tpu_custom_call.1} parent=0
    #allocation3 [shape = 'u8[65536]{0}', space=vmem, size = 0x10000, scoped, tag = 'input window, operand 0, single buffered']
    #allocation4 [shape = 's32[1]{0}', space=sflag, size = 0x4, scoped, tag = 'scoped memory for tpu_custom_call.1']
    #allocation5 [shape = 's32[1]{0}', space=sflag, size = 0x4, scoped, tag = 'scoped memory for tpu_custom_call.1']
    #allocation6 [shape = 'u8[32768]{0}', space=vmem, size = 0x8000, scoped, tag = 'input window, operand 1, single buffered']
    #allocation7 [shape = 's32[1]{0}', space=sflag, size = 0x4, scoped, tag = 'scoped memory for tpu_custom_call.1']
    #allocation8 [shape = 'u8[131072]{0}', space=vmem, size = 0x20000, scoped, tag = 'input window, operand 3, single buffered']
    #allocation9 [shape = 'u8[512]{0}', space=vmem, size = 0x400, scoped, tag = 'output window, operand 0, single buffered']
    %14 = vsyncpa [#allocation4], 0
    %15 = vsyncpa [#allocation7], 0
    %16 = vsyncpa [#allocation5], 0
    // Predicated region
    $region2: #{tpu_custom_call.1} parent=1 // pred_check
      _
    $region3: #{tpu_custom_call.1} parent=1 // pred_check_branch
      %18 = sbr.rel (0) target = $region5
    $region4: #{tpu_custom_call.1} parent=1 // pred_region
      %s20 = ssub.s32 2048, 128
      %21 = vsyncadd [#allocation4], %s20
      %s22 = sshll.u32 [#allocation3], 4
      %s23 = int_to_ptr.vmem [resolvable:$true] %s22
      %28 = dma.hbm_to_vmem [thread:$0]  %s0, 128, %s23, [#allocation4], 128, 128, 8
    $region5: #{tpu_custom_call.1} parent=1 // pred_fallthru
      _
    // Predicated region
    $region6: #{tpu_custom_call.1} parent=1 // pred_check
      _
    $region7: #{tpu_custom_call.1} parent=1 // pred_check_branch
      %30 = sbr.rel (0) target = $region9
    $region8: #{tpu_custom_call.1} parent=1 // pred_region
      %s32 = ssub.s32 1024, 1024
      %33 = vsyncadd [#allocation7], %s32
      %s34 = sshll.u32 [#allocation6], 4
      %s35 = int_to_ptr.vmem [resolvable:$true] %s34
      %40 = dma.hbm_to_vmem [thread:$0]  %s1, 1024, %s35, [#allocation7], 256, 256, 16
    $region9: #{tpu_custom_call.1} parent=1 // pred_fallthru
      _
    // Predicated region
    $region10: #{tpu_custom_call.1} parent=1 // pred_check
      _
    $region11: #{tpu_custom_call.1} parent=1 // pred_check_branch
      %42 = sbr.rel (0) target = $region13
    $region12: #{tpu_custom_call.1} parent=1 // pred_region
      _
    $region13: #{tpu_custom_call.1} parent=1 // pred_fallthru
      _
    // Predicated region
    $region14: #{tpu_custom_call.1} parent=1 // pred_check
      _
    $region15: #{tpu_custom_call.1} parent=1 // pred_check_branch
      %44 = sbr.rel (0) target = $region17
    $region16: #{tpu_custom_call.1} parent=1 // pred_region
      %s46 = ssub.s32 4096, 4096
      %47 = vsyncadd [#allocation7], %s46
      %s48 = sshll.u32 [#allocation8], 4
      %s49 = int_to_ptr.vmem [resolvable:$true] %s48
      %54 = dma.hbm_to_vmem [thread:$0]  %s3, 4096, %s49, [#allocation7], 128, 128, 8
    $region17: #{tpu_custom_call.1} parent=1 // pred_fallthru
      _
    // Predicated region
    $region18: #{tpu_custom_call.1} parent=1 // pred_check
      _
    $region19: #{tpu_custom_call.1} parent=1 // pred_check_branch
      %56 = sbr.rel (0) target = $region21
    $region20: #{tpu_custom_call.1} parent=1 // pred_region
      _
    $region21: #{tpu_custom_call.1} parent=1 // pred_fallthru
      _
    // Predicated region
    $region22: #{tpu_custom_call.1} parent=1 // pred_check
      _
    $region23: #{tpu_custom_call.1} parent=1 // pred_check_branch
      %58 = sbr.rel (0) target = $region25
    $region24: #{tpu_custom_call.1} parent=1 // pred_region
      _
    $region25: #{tpu_custom_call.1} parent=1 // pred_fallthru
      _
    // Predicated region
    $region26: #{tpu_custom_call.1} parent=1 // pred_check
      _
    $region27: #{tpu_custom_call.1} parent=1 // pred_check_branch
      %60 = sbr.rel (0) target = $region29
    $region28: #{tpu_custom_call.1} parent=1 // pred_region
      _
    $region29: #{tpu_custom_call.1} parent=1 // pred_fallthru
      _
    // Predicated region
    $region30: #{tpu_custom_call.1} parent=1 // pred_check
      _
    $region31: #{tpu_custom_call.1} parent=1 // pred_check_branch
      %62 = sbr.rel (0) target = $region33
    $region32: #{tpu_custom_call.1} parent=1 // pred_region
      %63 = dma.done [#allocation4], 2048
    $region33: #{tpu_custom_call.1} parent=1 // pred_fallthru
      _
    // Predicated region
    $region34: #{tpu_custom_call.1} parent=1 // pred_check
      _
    $region35: #{tpu_custom_call.1} parent=1 // pred_check_branch
      %65 = sbr.rel (0) target = $region37
    $region36: #{tpu_custom_call.1} parent=1 // pred_region
      %66 = dma.done [#allocation7], 1024
    $region37: #{tpu_custom_call.1} parent=1 // pred_fallthru
      _
    // Predicated region
    $region38: #{tpu_custom_call.1} parent=1 // pred_check
      _
    $region39: #{tpu_custom_call.1} parent=1 // pred_check_branch
      %68 = sbr.rel (0) target = $region41
    $region40: #{tpu_custom_call.1} parent=1 // pred_region
      %69 = dma.done [#allocation7], 4096
    $region41: #{tpu_custom_call.1} parent=1 // pred_fallthru
      _
    %v70 = vld [vmem:[#allocation3] sm:$0xff]
    %v71 = vld [vmem:[#allocation3 + $0x8] sm:$0xff]
    %v72 = vld [vmem:[#allocation3 + $0x10] sm:$0xff]
    %v73 = vld [vmem:[#allocation3 + $0x18] sm:$0xff]
    %v74 = vld [vmem:[#allocation3 + $0x20] sm:$0xff]
    %v75 = vld [vmem:[#allocation3 + $0x28] sm:$0xff]
    %v76 = vld [vmem:[#allocation3 + $0x30] sm:$0xff]
    %v77 = vld [vmem:[#allocation3 + $0x38] sm:$0xff]
    %v78 = vld [vmem:[#allocation3 + $0x40] sm:$0xff]
    %v79 = vld [vmem:[#allocation3 + $0x48] sm:$0xff]
    %v80 = vld [vmem:[#allocation3 + $0x50] sm:$0xff]
    %v81 = vld [vmem:[#allocation3 + $0x58] sm:$0xff]
    %v82 = vld [vmem:[#allocation3 + $0x60] sm:$0xff]
    %v83 = vld [vmem:[#allocation3 + $0x68] sm:$0xff]
    %v84 = vld [vmem:[#allocation3 + $0x70] sm:$0xff]
    %v85 = vld [vmem:[#allocation3 + $0x78] sm:$0xff]
    %v86 = vld [vmem:[#allocation6] sm:$0xff]
    %v87 = vld [vmem:[#allocation6 + $0x8] sm:$0xff]
    %v88 = vld [vmem:[#allocation6 + $0x10] sm:$0xff]
    %v89 = vld [vmem:[#allocation6 + $0x18] sm:$0xff]
    %v90 = vld [vmem:[#allocation6 + $0x20] sm:$0xff]
    %v91 = vld [vmem:[#allocation6 + $0x28] sm:$0xff]
    %v92 = vld [vmem:[#allocation6 + $0x30] sm:$0xff]
    %v93 = vld [vmem:[#allocation6 + $0x38] sm:$0xff]
    %v94 = vld [vmem:[%s2] sm:$0x3]
    %v96 = vlaneseq
    %v97 = vshrl.u32 %v96, 7
    %v98 = vsub.s32 0, %v97
    %v99 = vrot.slane %v94, %v98
    %v100 = vlaneseq
    %v101 = vshrl.u32 %v100, 7
    %v102 = vsub.s32 1, %v101
    %v103 = vrot.slane %v94, %v102
    %vm106 = vcmask 261120
    %v108 = vsel %vm106, %v70, 0
    %v111 = vsel %vm106, %v71, 0
    %v114 = vsel %vm106, %v72, 0
    %v117 = vsel %vm106, %v73, 0
    %v120 = vsel %vm106, %v74, 0
    %v123 = vsel %vm106, %v75, 0
    %v126 = vsel %vm106, %v76, 0
    %v129 = vsel %vm106, %v77, 0
    %v132 = vsel %vm106, %v78, 0
    %v135 = vsel %vm106, %v79, 0
    %v138 = vsel %vm106, %v80, 0
    %v141 = vsel %vm106, %v81, 0
    %v144 = vsel %vm106, %v82, 0
    %v147 = vsel %vm106, %v83, 0
    %v150 = vsel %vm106, %v84, 0
    %v153 = vsel %vm106, %v85, 0
    %155 = vmatprep.subr.mxu0 %v87
    %156 = vmatpush1.msra.mxu0 %v86
    %157 = vmatprep.subr.mxu0 %v89
    %158 = vmatpush1.msra.mxu0 %v88
    %159 = vmatprep.subr.mxu0 %v91
    %160 = vmatpush1.msra.mxu0 %v90
    %161 = vmatprep.subr.mxu0 %v93
    %162 = vmatpush1.msra.mxu0 %v92
    %163 = vmatprep.subr.mxu0 0.0
    %164 = vmatpush1.msra.mxu0 0.0
    %165 = vmatprep.subr.mxu0 0.0
    %166 = vmatpush1.msra.mxu0 0.0
    %167 = vmatprep.subr.mxu0 0.0
    %168 = vmatpush1.msra.mxu0 0.0
    %169 = vmatprep.subr.mxu0 0.0
    %170 = vmatpush1.msra.mxu0 0.0
    %171 = vmatprep.subr.mxu0 0.0
    %172 = vmatpush1.msra.mxu0 0.0
    %173 = vmatprep.subr.mxu0 0.0
    %174 = vmatpush1.msra.mxu0 0.0
    %175 = vmatprep.subr.mxu0 0.0
    %176 = vmatpush1.msra.mxu0 0.0
    %177 = vmatprep.subr.mxu0 0.0
    %178 = vmatpush1.msra.mxu0 0.0
    %179 = vmatprep.subr.mxu0 0.0
    %180 = vmatpush1.msra.mxu0 0.0
    %181 = vmatprep.subr.mxu0 0.0
    %182 = vmatpush1.msra.mxu0 0.0
    %183 = vmatprep.subr.mxu0 0.0
    %184 = vmatpush1.msra.mxu0 0.0
    %185 = vmatprep.subr.mxu0 0.0
    %186 = vmatpush1.msra.mxu0 0.0
    %187 = vmatprep.subr.mxu0 0.0
    %188 = vmatpush1.msra.mxu0 0.0
    %189 = vmatprep.subr.mxu0 0.0
    %190 = vmatpush1.msra.mxu0 0.0
    %191 = vmatprep.subr.mxu0 0.0
    %192 = vmatpush1.msra.mxu0 0.0
    %193 = vmatprep.subr.mxu0 0.0
    %194 = vmatpush1.msra.mxu0 0.0
    %195 = vmatprep.subr.mxu0 0.0
    %196 = vmatpush1.msra.mxu0 0.0
    %197 = vmatprep.subr.mxu0 0.0
    %198 = vmatpush1.msra.mxu0 0.0
    %199 = vmatprep.subr.mxu0 0.0
    %200 = vmatpush1.msra.mxu0 0.0
    %201 = vmatprep.subr.mxu0 0.0
    %202 = vmatpush1.msra.mxu0 0.0
    %203 = vmatprep.subr.mxu0 0.0
    %204 = vmatpush1.msra.mxu0 0.0
    %205 = vmatprep.subr.mxu0 0.0
    %206 = vmatpush1.msra.mxu0 0.0
    %207 = vmatprep.subr.mxu0 0.0
    %208 = vmatpush1.msra.mxu0 0.0
    %209 = vmatprep.subr.mxu0 0.0
    %210 = vmatpush1.msra.mxu0 0.0
    %211 = vmatprep.subr.mxu0 0.0
    %212 = vmatpush1.msra.mxu0 0.0
    %213 = vmatprep.subr.mxu0 0.0
    %214 = vmatpush1.msra.mxu0 0.0
    %215 = vmatprep.subr.mxu0 0.0
    %216 = vmatpush1.msra.mxu0 0.0
    %217 = vmatprep.subr.mxu0 0.0
    %218 = vmatpush1.msra.mxu0 0.0
    %219 = vmatprep.mubr.f32.mxu0 0.0
    %220 = vmatmul.mubr.f32.gmra.mrb[0].mxu0 %v108
    %v221 = vpop.f32.mrb[0].mxu0
    %v222 = vadd.f32 %v99, %v221
    %v223 = vpop.f32.mrb[0].mxu0
    %v224 = vadd.f32 %v103, %v223
    %225 = vmatprep.mubr.f32.mxu0 0.0
    %226 = vmatmul.mubr.f32.gmra.mrb[0].mxu0 %v111
    %v227 = vpop.f32.mrb[0].mxu0
    %v228 = vadd.f32 %v99, %v227
    %v229 = vpop.f32.mrb[0].mxu0
    %v230 = vadd.f32 %v103, %v229
    %231 = vmatprep.mubr.f32.mxu0 0.0
    %232 = vmatmul.mubr.f32.gmra.mrb[0].mxu0 %v114
    %v233 = vpop.f32.mrb[0].mxu0
    %v234 = vadd.f32 %v99, %v233
    %v235 = vpop.f32.mrb[0].mxu0
    %v236 = vadd.f32 %v103, %v235
    %237 = vmatprep.mubr.f32.mxu0 0.0
    %238 = vmatmul.mubr.f32.gmra.mrb[0].mxu0 %v117
    %v239 = vpop.f32.mrb[0].mxu0
    %v240 = vadd.f32 %v99, %v239
    %v241 = vpop.f32.mrb[0].mxu0
    %v242 = vadd.f32 %v103, %v241
    %243 = vmatprep.mubr.f32.mxu0 0.0
    %244 = vmatmul.mubr.f32.gmra.mrb[0].mxu0 %v120
    %v245 = vpop.f32.mrb[0].mxu0
    %v246 = vadd.f32 %v99, %v245
    %v247 = vpop.f32.mrb[0].mxu0
    %v248 = vadd.f32 %v103, %v247
    %249 = vmatprep.mubr.f32.mxu0 0.0
    %250 = vmatmul.mubr.f32.gmra.mrb[0].mxu0 %v123
    %v251 = vpop.f32.mrb[0].mxu0
    %v252 = vadd.f32 %v99, %v251
    %v253 = vpop.f32.mrb[0].mxu0
    %v254 = vadd.f32 %v103, %v253
    %255 = vmatprep.mubr.f32.mxu0 0.0
    %256 = vmatmul.mubr.f32.gmra.mrb[0].mxu0 %v126
    %v257 = vpop.f32.mrb[0].mxu0
    %v258 = vadd.f32 %v99, %v257
    %v259 = vpop.f32.mrb[0].mxu0
    %v260 = vadd.f32 %v103, %v259
    %261 = vmatprep.mubr.f32.mxu0 0.0
    %262 = vmatmul.mubr.f32.gmra.mrb[0].mxu0 %v129
    %v263 = vpop.f32.mrb[0].mxu0
    %v264 = vadd.f32 %v99, %v263
    %v265 = vpop.f32.mrb[0].mxu0
    %v266 = vadd.f32 %v103, %v265
    %267 = vmatprep.mubr.f32.mxu0 0.0
    %268 = vmatmul.mubr.f32.gmra.mrb[0].mxu0 %v132
    %v269 = vpop.f32.mrb[0].mxu0
    %v270 = vadd.f32 %v99, %v269
    %v271 = vpop.f32.mrb[0].mxu0
    %v272 = vadd.f32 %v103, %v271
    %273 = vmatprep.mubr.f32.mxu0 0.0
    %274 = vmatmul.mubr.f32.gmra.mrb[0].mxu0 %v135
    %v275 = vpop.f32.mrb[0].mxu0
    %v276 = vadd.f32 %v99, %v275
    %v277 = vpop.f32.mrb[0].mxu0
    %v278 = vadd.f32 %v103, %v277
    %279 = vmatprep.mubr.f32.mxu0 0.0
    %280 = vmatmul.mubr.f32.gmra.mrb[0].mxu0 %v138
    %v281 = vpop.f32.mrb[0].mxu0
    %v282 = vadd.f32 %v99, %v281
    %v283 = vpop.f32.mrb[0].mxu0
    %v284 = vadd.f32 %v103, %v283
    %285 = vmatprep.mubr.f32.mxu0 0.0
    %286 = vmatmul.mubr.f32.gmra.mrb[0].mxu0 %v141
    %v287 = vpop.f32.mrb[0].mxu0
    %v288 = vadd.f32 %v99, %v287
    %v289 = vpop.f32.mrb[0].mxu0
    %v290 = vadd.f32 %v103, %v289
    %291 = vmatprep.mubr.f32.mxu0 0.0
    %292 = vmatmul.mubr.f32.gmra.mrb[0].mxu0 %v144
    %v293 = vpop.f32.mrb[0].mxu0
    %v294 = vadd.f32 %v99, %v293
    %v295 = vpop.f32.mrb[0].mxu0
    %v296 = vadd.f32 %v103, %v295
    %297 = vmatprep.mubr.f32.mxu0 0.0
    %298 = vmatmul.mubr.f32.gmra.mrb[0].mxu0 %v147
    %v299 = vpop.f32.mrb[0].mxu0
    %v300 = vadd.f32 %v99, %v299
    %v301 = vpop.f32.mrb[0].mxu0
    %v302 = vadd.f32 %v103, %v301
    %303 = vmatprep.mubr.f32.mxu0 0.0
    %304 = vmatmul.mubr.f32.gmra.mrb[0].mxu0 %v150
    %v305 = vpop.f32.mrb[0].mxu0
    %v306 = vadd.f32 %v99, %v305
    %v307 = vpop.f32.mrb[0].mxu0
    %v308 = vadd.f32 %v103, %v307
    %309 = vmatprep.mubr.f32.mxu0 0.0
    %310 = vmatmul.mubr.f32.gmra.mrb[0].mxu0 %v153
    %v311 = vpop.f32.mrb[0].mxu0
    %v312 = vadd.f32 %v99, %v311
    %v313 = vpop.f32.mrb[0].mxu0
    %v314 = vadd.f32 %v103, %v313
    %315 = vdwg.mxu0
    %v316 = vmax.f32 %v222, 0.0
    %v317 = vmax.f32 %v224, 0.0
    %v318 = vmax.f32 %v228, 0.0
    %v319 = vmax.f32 %v230, 0.0
    %v320 = vmax.f32 %v234, 0.0
    %v321 = vmax.f32 %v236, 0.0
    %v322 = vmax.f32 %v240, 0.0
    %v323 = vmax.f32 %v242, 0.0
    %v324 = vmax.f32 %v246, 0.0
    %v325 = vmax.f32 %v248, 0.0
    %v326 = vmax.f32 %v252, 0.0
    %v327 = vmax.f32 %v254, 0.0
    %v328 = vmax.f32 %v258, 0.0
    %v329 = vmax.f32 %v260, 0.0
    %v330 = vmax.f32 %v264, 0.0
    %v331 = vmax.f32 %v266, 0.0
    %v332 = vmax.f32 %v270, 0.0
    %v333 = vmax.f32 %v272, 0.0
    %v334 = vmax.f32 %v276, 0.0
    %v335 = vmax.f32 %v278, 0.0
    %v336 = vmax.f32 %v282, 0.0
    %v337 = vmax.f32 %v284, 0.0
    %v338 = vmax.f32 %v288, 0.0
    %v339 = vmax.f32 %v290, 0.0
    %v340 = vmax.f32 %v294, 0.0
    %v341 = vmax.f32 %v296, 0.0
    %v342 = vmax.f32 %v300, 0.0
    %v343 = vmax.f32 %v302, 0.0
    %v344 = vmax.f32 %v306, 0.0
    %v345 = vmax.f32 %v308, 0.0
    %v346 = vmax.f32 %v312, 0.0
    %v347 = vmax.f32 %v314, 0.0
    %v348 = vld [vmem:[#allocation8] sm:$0xff]
    %v349 = vld [vmem:[#allocation8 + $0x8] sm:$0xff]
    %v350 = vld [vmem:[#allocation8 + $0x10] sm:$0xff]
    %v351 = vld [vmem:[#allocation8 + $0x18] sm:$0xff]
    %v352 = vld [vmem:[#allocation8 + $0x20] sm:$0xff]
    %v353 = vld [vmem:[#allocation8 + $0x28] sm:$0xff]
    %v354 = vld [vmem:[#allocation8 + $0x30] sm:$0xff]
    %v355 = vld [vmem:[#allocation8 + $0x38] sm:$0xff]
    %v356 = vld [vmem:[#allocation8 + $0x40] sm:$0xff]
    %v357 = vld [vmem:[#allocation8 + $0x48] sm:$0xff]
    %v358 = vld [vmem:[#allocation8 + $0x50] sm:$0xff]
    %v359 = vld [vmem:[#allocation8 + $0x58] sm:$0xff]
    %v360 = vld [vmem:[#allocation8 + $0x60] sm:$0xff]
    %v361 = vld [vmem:[#allocation8 + $0x68] sm:$0xff]
    %v362 = vld [vmem:[#allocation8 + $0x70] sm:$0xff]
    %v363 = vld [vmem:[#allocation8 + $0x78] sm:$0xff]
    %v364 = vld [vmem:[#allocation8 + $0x80] sm:$0xff]
    %v365 = vld [vmem:[#allocation8 + $0x88] sm:$0xff]
    %v366 = vld [vmem:[#allocation8 + $0x90] sm:$0xff]
    %v367 = vld [vmem:[#allocation8 + $0x98] sm:$0xff]
    %v368 = vld [vmem:[#allocation8 + $0xa0] sm:$0xff]
    %v369 = vld [vmem:[#allocation8 + $0xa8] sm:$0xff]
    %v370 = vld [vmem:[#allocation8 + $0xb0] sm:$0xff]
    %v371 = vld [vmem:[#allocation8 + $0xb8] sm:$0xff]
    %v372 = vld [vmem:[#allocation8 + $0xc0] sm:$0xff]
    %v373 = vld [vmem:[#allocation8 + $0xc8] sm:$0xff]
    %v374 = vld [vmem:[#allocation8 + $0xd0] sm:$0xff]
    %v375 = vld [vmem:[#allocation8 + $0xd8] sm:$0xff]
    %v376 = vld [vmem:[#allocation8 + $0xe0] sm:$0xff]
    %v377 = vld [vmem:[#allocation8 + $0xe8] sm:$0xff]
    %v378 = vld [vmem:[#allocation8 + $0xf0] sm:$0xff]
    %v379 = vld [vmem:[#allocation8 + $0xf8] sm:$0xff]
    %v380 = vld [vmem:[%s4] sm:$0x1]
    %v382 = vlaneseq
    %v383 = vshrl.u32 %v382, 7
    %v384 = vsub.s32 0, %v383
    %v385 = vrot.slane %v380, %v384
    %387 = vmatprep.subr.mxu0 0.0
    %388 = vmatpush1.msra.mxu0 %v348
    %389 = vmatprep.subr.mxu0 0.0
    %390 = vmatpush1.msra.mxu0 %v349
    %391 = vmatprep.subr.mxu0 0.0
    %392 = vmatpush1.msra.mxu0 %v350
    %393 = vmatprep.subr.mxu0 0.0
    %394 = vmatpush1.msra.mxu0 %v351
    %395 = vmatprep.subr.mxu0 0.0
    %396 = vmatpush1.msra.mxu0 %v352
    %397 = vmatprep.subr.mxu0 0.0
    %398 = vmatpush1.msra.mxu0 %v353
    %399 = vmatprep.subr.mxu0 0.0
    %400 = vmatpush1.msra.mxu0 %v354
    %401 = vmatprep.subr.mxu0 0.0
    %402 = vmatpush1.msra.mxu0 %v355
    %403 = vmatprep.subr.mxu0 0.0
    %404 = vmatpush1.msra.mxu0 %v356
    %405 = vmatprep.subr.mxu0 0.0
    %406 = vmatpush1.msra.mxu0 %v357
    %407 = vmatprep.subr.mxu0 0.0
    %408 = vmatpush1.msra.mxu0 %v358
    %409 = vmatprep.subr.mxu0 0.0
    %410 = vmatpush1.msra.mxu0 %v359
    %411 = vmatprep.subr.mxu0 0.0
    %412 = vmatpush1.msra.mxu0 %v360
    %413 = vmatprep.subr.mxu0 0.0
    %414 = vmatpush1.msra.mxu0 %v361
    %415 = vmatprep.subr.mxu0 0.0
    %416 = vmatpush1.msra.mxu0 %v362
    %417 = vmatprep.subr.mxu0 0.0
    %418 = vmatpush1.msra.mxu0 %v363
    %419 = vmatprep.subr.mxu0 0.0
    %420 = vmatpush1.msra.mxu0 %v364
    %421 = vmatprep.subr.mxu0 0.0
    %422 = vmatpush1.msra.mxu0 %v365
    %423 = vmatprep.subr.mxu0 0.0
    %424 = vmatpush1.msra.mxu0 %v366
    %425 = vmatprep.subr.mxu0 0.0
    %426 = vmatpush1.msra.mxu0 %v367
    %427 = vmatprep.subr.mxu0 0.0
    %428 = vmatpush1.msra.mxu0 %v368
    %429 = vmatprep.subr.mxu0 0.0
    %430 = vmatpush1.msra.mxu0 %v369
    %431 = vmatprep.subr.mxu0 0.0
    %432 = vmatpush1.msra.mxu0 %v370
    %433 = vmatprep.subr.mxu0 0.0
    %434 = vmatpush1.msra.mxu0 %v371
    %435 = vmatprep.subr.mxu0 0.0
    %436 = vmatpush1.msra.mxu0 %v372
    %437 = vmatprep.subr.mxu0 0.0
    %438 = vmatpush1.msra.mxu0 %v373
    %439 = vmatprep.subr.mxu0 0.0
    %440 = vmatpush1.msra.mxu0 %v374
    %441 = vmatprep.subr.mxu0 0.0
    %442 = vmatpush1.msra.mxu0 %v375
    %443 = vmatprep.subr.mxu0 0.0
    %444 = vmatpush1.msra.mxu0 %v376
    %445 = vmatprep.subr.mxu0 0.0
    %446 = vmatpush1.msra.mxu0 %v377
    %447 = vmatprep.subr.mxu0 0.0
    %448 = vmatpush1.msra.mxu0 %v378
    %449 = vmatprep.subr.mxu0 0.0
    %450 = vmatpush1.msra.mxu0 %v379
    %451 = vmatprep.mubr.f32.mxu0 %v317
    %452 = vmatmul.mubr.f32.gmra.mrb[0].mxu0 %v316
    %v453 = vpop.f32.mrb[0].mxu0
    %v454 = vadd.f32 %v385, %v453
    %v455 = vpop.f32.mrb[0].mxu0
    %456 = vmatprep.mubr.f32.mxu0 %v319
    %457 = vmatmul.mubr.f32.gmra.mrb[0].mxu0 %v318
    %v458 = vpop.f32.mrb[0].mxu0
    %v459 = vadd.f32 %v385, %v458
    %v460 = vpop.f32.mrb[0].mxu0
    %461 = vmatprep.mubr.f32.mxu0 %v321
    %462 = vmatmul.mubr.f32.gmra.mrb[0].mxu0 %v320
    %v463 = vpop.f32.mrb[0].mxu0
    %v464 = vadd.f32 %v385, %v463
    %v465 = vpop.f32.mrb[0].mxu0
    %466 = vmatprep.mubr.f32.mxu0 %v323
    %467 = vmatmul.mubr.f32.gmra.mrb[0].mxu0 %v322
    %v468 = vpop.f32.mrb[0].mxu0
    %v469 = vadd.f32 %v385, %v468
    %v470 = vpop.f32.mrb[0].mxu0
    %471 = vmatprep.mubr.f32.mxu0 %v325
    %472 = vmatmul.mubr.f32.gmra.mrb[0].mxu0 %v324
    %v473 = vpop.f32.mrb[0].mxu0
    %v474 = vadd.f32 %v385, %v473
    %v475 = vpop.f32.mrb[0].mxu0
    %476 = vmatprep.mubr.f32.mxu0 %v327
    %477 = vmatmul.mubr.f32.gmra.mrb[0].mxu0 %v326
    %v478 = vpop.f32.mrb[0].mxu0
    %v479 = vadd.f32 %v385, %v478
    %v480 = vpop.f32.mrb[0].mxu0
    %481 = vmatprep.mubr.f32.mxu0 %v329
    %482 = vmatmul.mubr.f32.gmra.mrb[0].mxu0 %v328
    %v483 = vpop.f32.mrb[0].mxu0
    %v484 = vadd.f32 %v385, %v483
    %v485 = vpop.f32.mrb[0].mxu0
    %486 = vmatprep.mubr.f32.mxu0 %v331
    %487 = vmatmul.mubr.f32.gmra.mrb[0].mxu0 %v330
    %v488 = vpop.f32.mrb[0].mxu0
    %v489 = vadd.f32 %v385, %v488
    %v490 = vpop.f32.mrb[0].mxu0
    %491 = vmatprep.mubr.f32.mxu0 %v333
    %492 = vmatmul.mubr.f32.gmra.mrb[0].mxu0 %v332
    %v493 = vpop.f32.mrb[0].mxu0
    %v494 = vadd.f32 %v385, %v493
    %v495 = vpop.f32.mrb[0].mxu0
    %496 = vmatprep.mubr.f32.mxu0 %v335
    %497 = vmatmul.mubr.f32.gmra.mrb[0].mxu0 %v334
    %v498 = vpop.f32.mrb[0].mxu0
    %v499 = vadd.f32 %v385, %v498
    %v500 = vpop.f32.mrb[0].mxu0
    %501 = vmatprep.mubr.f32.mxu0 %v337
    %502 = vmatmul.mubr.f32.gmra.mrb[0].mxu0 %v336
    %v503 = vpop.f32.mrb[0].mxu0
    %v504 = vadd.f32 %v385, %v503
    %v505 = vpop.f32.mrb[0].mxu0
    %506 = vmatprep.mubr.f32.mxu0 %v339
    %507 = vmatmul.mubr.f32.gmra.mrb[0].mxu0 %v338
    %v508 = vpop.f32.mrb[0].mxu0
    %v509 = vadd.f32 %v385, %v508
    %v510 = vpop.f32.mrb[0].mxu0
    %511 = vmatprep.mubr.f32.mxu0 %v341
    %512 = vmatmul.mubr.f32.gmra.mrb[0].mxu0 %v340
    %v513 = vpop.f32.mrb[0].mxu0
    %v514 = vadd.f32 %v385, %v513
    %v515 = vpop.f32.mrb[0].mxu0
    %516 = vmatprep.mubr.f32.mxu0 %v343
    %517 = vmatmul.mubr.f32.gmra.mrb[0].mxu0 %v342
    %v518 = vpop.f32.mrb[0].mxu0
    %v519 = vadd.f32 %v385, %v518
    %v520 = vpop.f32.mrb[0].mxu0
    %521 = vmatprep.mubr.f32.mxu0 %v345
    %522 = vmatmul.mubr.f32.gmra.mrb[0].mxu0 %v344
    %v523 = vpop.f32.mrb[0].mxu0
    %v524 = vadd.f32 %v385, %v523
    %v525 = vpop.f32.mrb[0].mxu0
    %526 = vmatprep.mubr.f32.mxu0 %v347
    %527 = vmatmul.mubr.f32.gmra.mrb[0].mxu0 %v346
    %v528 = vpop.f32.mrb[0].mxu0
    %v529 = vadd.f32 %v385, %v528
    %v530 = vpop.f32.mrb[0].mxu0
    %531 = vdwg.mxu0
    %v532 = vmax.f32 %v454, 0.0
    %v533 = vmax.f32 %v459, 0.0
    %v534 = vmax.f32 %v464, 0.0
    %v535 = vmax.f32 %v469, 0.0
    %v536 = vmax.f32 %v474, 0.0
    %v537 = vmax.f32 %v479, 0.0
    %v538 = vmax.f32 %v484, 0.0
    %v539 = vmax.f32 %v489, 0.0
    %v540 = vmax.f32 %v494, 0.0
    %v541 = vmax.f32 %v499, 0.0
    %v542 = vmax.f32 %v504, 0.0
    %v543 = vmax.f32 %v509, 0.0
    %v544 = vmax.f32 %v514, 0.0
    %v545 = vmax.f32 %v519, 0.0
    %v546 = vmax.f32 %v524, 0.0
    %v547 = vmax.f32 %v529, 0.0
    %v548 = vld [vmem:[%s5] sm:$0x1]
    %v550 = vlaneseq
    %v551 = vshrl.u32 %v550, 7
    %v552 = vsub.s32 0, %v551
    %v553 = vrot.slane %v548, %v552
    %v555 = vmul.f32 %v532, %v553
    %v556 = vmul.f32 %v533, %v553
    %v557 = vmul.f32 %v534, %v553
    %v558 = vmul.f32 %v535, %v553
    %v559 = vmul.f32 %v536, %v553
    %v560 = vmul.f32 %v537, %v553
    %v561 = vmul.f32 %v538, %v553
    %v562 = vmul.f32 %v539, %v553
    %v563 = vmul.f32 %v540, %v553
    %v564 = vmul.f32 %v541, %v553
    %v565 = vmul.f32 %v542, %v553
    %v566 = vmul.f32 %v543, %v553
    %v567 = vmul.f32 %v544, %v553
    %v568 = vmul.f32 %v545, %v553
    %v569 = vmul.f32 %v546, %v553
    %v570 = vmul.f32 %v547, %v553
    %571 = vadd.xlane.f32.xlu0 %v555
    %v572 = vpop.xlane.xlu0 %571
    %573 = vadd.xlane.f32.xlu0 %v556
    %v574 = vpop.xlane.xlu0 %573
    %575 = vadd.xlane.f32.xlu0 %v557
    %v576 = vpop.xlane.xlu0 %575
    %577 = vadd.xlane.f32.xlu0 %v558
    %v578 = vpop.xlane.xlu0 %577
    %579 = vadd.xlane.f32.xlu0 %v559
    %v580 = vpop.xlane.xlu0 %579
    %581 = vadd.xlane.f32.xlu0 %v560
    %v582 = vpop.xlane.xlu0 %581
    %583 = vadd.xlane.f32.xlu0 %v561
    %v584 = vpop.xlane.xlu0 %583
    %585 = vadd.xlane.f32.xlu0 %v562
    %v586 = vpop.xlane.xlu0 %585
    %587 = vadd.xlane.f32.xlu0 %v563
    %v588 = vpop.xlane.xlu0 %587
    %589 = vadd.xlane.f32.xlu0 %v564
    %v590 = vpop.xlane.xlu0 %589
    %591 = vadd.xlane.f32.xlu0 %v565
    %v592 = vpop.xlane.xlu0 %591
    %593 = vadd.xlane.f32.xlu0 %v566
    %v594 = vpop.xlane.xlu0 %593
    %595 = vadd.xlane.f32.xlu0 %v567
    %v596 = vpop.xlane.xlu0 %595
    %597 = vadd.xlane.f32.xlu0 %v568
    %v598 = vpop.xlane.xlu0 %597
    %599 = vadd.xlane.f32.xlu0 %v569
    %v600 = vpop.xlane.xlu0 %599
    %601 = vadd.xlane.f32.xlu0 %v570
    %v602 = vpop.xlane.xlu0 %601
    %v603 = vld [vmem:[#allocation2] sm:$0x1]
    %605 = vset.pattern.permute.xlu0 0
    %606 = vperm.xlu0 %605, %v603
    %v607 = vpop.permute.xlu0 %606
    %v609 = vlaneseq
    %v610 = vshrl.u32 %v609, 7
    %v611 = vsub.s32 0, %v610
    %v612 = vrot.slane %v607, %v611
    %v613 = vadd.f32 %v572, %v612
    %v614 = vadd.f32 %v574, %v612
    %v615 = vadd.f32 %v576, %v612
    %v616 = vadd.f32 %v578, %v612
    %v617 = vadd.f32 %v580, %v612
    %v618 = vadd.f32 %v582, %v612
    %v619 = vadd.f32 %v584, %v612
    %v620 = vadd.f32 %v586, %v612
    %v621 = vadd.f32 %v588, %v612
    %v622 = vadd.f32 %v590, %v612
    %v623 = vadd.f32 %v592, %v612
    %v624 = vadd.f32 %v594, %v612
    %v625 = vadd.f32 %v596, %v612
    %v626 = vadd.f32 %v598, %v612
    %v627 = vadd.f32 %v600, %v612
    %v628 = vadd.f32 %v602, %v612
    %v645 = vlaneseq
    %v646 = vand.u32 %v645, 127
    %v647 = vlaneseq
    %v648 = vshrl.u32 %v647, 7
    %v649 = vsub.s32 %v646, %v648
    %v650 = vrot.slane %v613, %v649
    %v651 = vadd.s32 %v646, 4294967288
    %v652 = vlaneseq
    %v653 = vshrl.u32 %v652, 7
    %v654 = vsub.s32 %v651, %v653
    %v655 = vrot.slane %v614, %v654
    %vm656 = vcmask 130112
    %v657 = vsel %vm656, %v655, %v650
    %v658 = vadd.s32 %v646, 4294967280
    %v659 = vlaneseq
    %v660 = vshrl.u32 %v659, 7
    %v661 = vsub.s32 %v658, %v660
    %v662 = vrot.slane %v615, %v661
    %vm663 = vcmask 195712
    %v664 = vsel %vm663, %v662, %v657
    %v665 = vadd.s32 %v646, 4294967272
    %v666 = vlaneseq
    %v667 = vshrl.u32 %v666, 7
    %v668 = vsub.s32 %v665, %v667
    %v669 = vrot.slane %v616, %v668
    %vm670 = vcmask 261312
    %v671 = vsel %vm670, %v669, %v664
    %v672 = vadd.s32 %v646, 4294967264
    %v673 = vlaneseq
    %v674 = vshrl.u32 %v673, 7
    %v675 = vsub.s32 %v672, %v674
    %v676 = vrot.slane %v617, %v675
    %vm677 = vcmask 326912
    %v678 = vsel %vm677, %v676, %v671
    %v679 = vadd.s32 %v646, 4294967256
    %v680 = vlaneseq
    %v681 = vshrl.u32 %v680, 7
    %v682 = vsub.s32 %v679, %v681
    %v683 = vrot.slane %v618, %v682
    %vm684 = vcmask 392512
    %v685 = vsel %vm684, %v683, %v678
    %v686 = vadd.s32 %v646, 4294967248
    %v687 = vlaneseq
    %v688 = vshrl.u32 %v687, 7
    %v689 = vsub.s32 %v686, %v688
    %v690 = vrot.slane %v619, %v689
    %vm691 = vcmask 458112
    %v692 = vsel %vm691, %v690, %v685
    %v693 = vadd.s32 %v646, 4294967240
    %v694 = vlaneseq
    %v695 = vshrl.u32 %v694, 7
    %v696 = vsub.s32 %v693, %v695
    %v697 = vrot.slane %v620, %v696
    %vm698 = vcmask 523712
    %v699 = vsel %vm698, %v697, %v692
    %v700 = vadd.s32 %v646, 4294967232
    %v701 = vlaneseq
    %v702 = vshrl.u32 %v701, 7
    %v703 = vsub.s32 %v700, %v702
    %v704 = vrot.slane %v621, %v703
    %vm705 = vcmask 589312
    %v706 = vsel %vm705, %v704, %v699
    %v707 = vadd.s32 %v646, 4294967224
    %v708 = vlaneseq
    %v709 = vshrl.u32 %v708, 7
    %v710 = vsub.s32 %v707, %v709
    %v711 = vrot.slane %v622, %v710
    %vm712 = vcmask 654912
    %v713 = vsel %vm712, %v711, %v706
    %v714 = vadd.s32 %v646, 4294967216
    %v715 = vlaneseq
    %v716 = vshrl.u32 %v715, 7
    %v717 = vsub.s32 %v714, %v716
    %v718 = vrot.slane %v623, %v717
    %vm719 = vcmask 720512
    %v720 = vsel %vm719, %v718, %v713
    %v721 = vadd.s32 %v646, 4294967208
    %v722 = vlaneseq
    %v723 = vshrl.u32 %v722, 7
    %v724 = vsub.s32 %v721, %v723
    %v725 = vrot.slane %v624, %v724
    %vm726 = vcmask 786112
    %v727 = vsel %vm726, %v725, %v720
    %v728 = vadd.s32 %v646, 4294967200
    %v729 = vlaneseq
    %v730 = vshrl.u32 %v729, 7
    %v731 = vsub.s32 %v728, %v730
    %v732 = vrot.slane %v625, %v731
    %vm733 = vcmask 851712
    %v734 = vsel %vm733, %v732, %v727
    %v735 = vadd.s32 %v646, 4294967192
    %v736 = vlaneseq
    %v737 = vshrl.u32 %v736, 7
    %v738 = vsub.s32 %v735, %v737
    %v739 = vrot.slane %v626, %v738
    %vm740 = vcmask 917312
    %v741 = vsel %vm740, %v739, %v734
    %v742 = vadd.s32 %v646, 4294967184
    %v743 = vlaneseq
    %v744 = vshrl.u32 %v743, 7
    %v745 = vsub.s32 %v742, %v744
    %v746 = vrot.slane %v627, %v745
    %vm747 = vcmask 982912
    %v748 = vsel %vm747, %v746, %v741
    %v749 = vadd.s32 %v646, 4294967176
    %v750 = vlaneseq
    %v751 = vshrl.u32 %v750, 7
    %v752 = vsub.s32 %v749, %v751
    %v753 = vrot.slane %v628, %v752
    %vm754 = vcmask 1048512
    %v755 = vsel %vm754, %v753, %v748
    %757 = vst [vmem:[#allocation9] sm:$0x1] %v755
    // Predicated region
    $region42: #{tpu_custom_call.1} parent=1 // pred_check
      _
    $region43: #{tpu_custom_call.1} parent=1 // pred_check_branch
      %759 = sbr.rel (0) target = $region45
    $region44: #{tpu_custom_call.1} parent=1 // pred_region
      %s761 = ssub.s32 16, 16
      %762 = vsyncadd [#allocation5], %s761
      %s764 = sshll.u32 [#allocation9], 4
      %s765 = int_to_ptr.vmem [resolvable:$true] %s764
      %767 = dma.vmem_to_hbm [thread:$0]  %s765, 16, %s7, [#allocation5]
    $region45: #{tpu_custom_call.1} parent=1 // pred_fallthru
      _
    // Predicated region
    $region46: #{tpu_custom_call.1} parent=1 // pred_check
      _
    $region47: #{tpu_custom_call.1} parent=1 // pred_check_branch
      %769 = sbr.rel (0) target = $region49
    $region48: #{tpu_custom_call.1} parent=1 // pred_region
      %770 = dma.done [#allocation5], 16
    $region49: #{tpu_custom_call.1} parent=1 // pred_fallthru
      _
    %771 = vsyncpa [#allocation4], 1
    %772 = vsyncpa [#allocation7], 1
    %773 = vsyncpa [#allocation5], 1

</llo_original>
